<compile_context>
chip_gen: v7x
topology: tpu7x:2x2x1
jax: 0.10.0
libtpu: 0.0.40
codegen_flags: <defaults>
</compile_context>

<pallas_src>
import functools

import jax
import jax.numpy as jnp
import numpy as np
from jax.experimental import pallas as pl
from jax.experimental.pallas import tpu as pltpu

_LANE = 128  # vreg lane width


def _round_up(a, b):
    return -(-a // b) * b


def _sublane(itemsize):
    # f32 -> 8, bf16 -> 16, int8/fp8 -> 32 (sub-32-bit dtypes pack along sublanes).
    return max(8, 32 // itemsize)


def _default_block_bytes():
    """Per-step (in+out, lane-padded) VMEM target in bytes."""
    try:
        cap = pltpu.get_tpu_info().vmem_capacity_bytes
    except Exception:  # interpret mode / older API: be conservative.
        cap = 128 << 20
    # v7x-class (64 MiB VMEM, ~3.2 TB/s HBM): bigger steps to amortize the
    # ~0.35us/step overhead.  v5e/v6e (128 MiB VMEM): 4-8 MiB already sits at
    # ~85% of the measured copy roofline.
    return (16 << 20) if cap <= (64 << 20) else (8 << 20)


def _pick_group(rows, L, Lo, max_g=16):
    """Smallest divisor G of `rows` making the output lane width G*Lo >= 128.

    Prefers a G with both G*L and G*Lo multiples of 128 (fully unmasked
    loads/stores).  Falls back to the largest small divisor, or 1 (no packing).
    """
    best = 1
    for g in range(1, min(rows, max_g) + 1):
        if rows % g:
            continue
        if g * Lo >= _LANE:
            if best == 1:
                best = g
            if (g * Lo) % _LANE == 0 and (g * L) % _LANE == 0:
                return g
    if best == 1:
        for g in range(min(rows, max_g), 1, -1):
            if rows % g == 0:
                return g
    return best


def _pad1d_kernel(x_ref, o_ref, *, up, dn, L, G):
    # x_ref : (tb, G*L)              packed input rows
    # o_ref : (tb, G*(up + L + dn))  packed padded rows
    # up/dn/L/G are Python ints -> loop fully unrolled, all offsets static.
    if up == 0 and dn == 0:
        # k == 1: pure copy, single unmasked full-tile store.
        o_ref[...] = x_ref[...]
        return
    rows = o_ref.shape[0]
    dtype = o_ref.dtype
    z_up = jnp.zeros((rows, up), dtype) if up > 0 else None
    z_dn = jnp.zeros((rows, dn), dtype) if dn > 0 else None
    pieces = []
    for g in range(G):
        if up > 0:
            pieces.append(z_up)
        pieces.append(x_ref[:, g * L:(g + 1) * L])
        if dn > 0:
            pieces.append(z_dn)
    # Assemble the whole padded tile in vregs and issue ONE dense store.
    o_ref[...] = jnp.concatenate(pieces, axis=-1)


def compensate_pad1d(x, k, *, block_bytes=None, block_rows=None):
    """Equivalent of CompensatePad1D(k).forward(x): zero-pad the last dim."""
    up, dn = k // 2, (k - 1) // 2
    *lead, L = x.shape
    Lo = L + up + dn
    R = int(np.prod(lead)) if lead else 1

    itemsize = jnp.dtype(x.dtype).itemsize
    sub = _sublane(itemsize)

    # ---- Lane packing (small-L regime only; large L is already HBM-bound). --
    G = 1
    if Lo < _LANE and R > 1:
        G = _pick_group(R, L, Lo)
    Rg = R // G
    w_in, w_out = G * L, G * Lo
    x2 = x.reshape(Rg, w_in)  # free: grouped rows are contiguous in HBM

    # ---- Row-block sizing with lane-PADDED VMEM accounting. ----------------
    row_bytes = (_round_up(w_in, _LANE) + _round_up(w_out, _LANE)) * itemsize
    if block_bytes is None:
        block_bytes = _default_block_bytes()
    tb = max(sub, (block_bytes // row_bytes) // sub * sub)
    if Rg > sub:
        # Keep >= 2 row blocks when the row count permits: enables megacore
        # sharding of the "parallel" axis (v7x) and DMA/compute overlap.
        tb = min(tb, _round_up(pl.cdiv(Rg, 2), sub))
    if block_rows is not None:
        tb = block_rows
    if tb >= Rg:
        tb = Rg  # block dim == full array dim: always legal
    grid = (pl.cdiv(Rg, tb),)

    # Explicit scoped-VMEM limit: double-buffered padded in+out blocks plus
    # headroom; never set below the 32 MiB default (we only ever raise it).
    need = 2 * _round_up(tb, sub) * row_bytes
    vmem_limit = max(int(need * 1.25) + (2 << 20), 32 << 20)

    kernel = functools.partial(_pad1d_kernel, up=up, dn=dn, L=L, G=G)

    out2 = pl.pallas_call(
        kernel,
        out_shape=jax.ShapeDtypeStruct((Rg, w_out), x.dtype),
        grid=grid,
        in_specs=[pl.BlockSpec((tb, w_in), lambda i: (i, 0))],
        out_specs=pl.BlockSpec((tb, w_out), lambda i: (i, 0)),
        compiler_params=pltpu.CompilerParams(
            dimension_semantics=("parallel",),
            vmem_limit_bytes=vmem_limit,
        ),
    )(x2)

    return out2.reshape(*lead, Lo)


def _ref_pad(x, k):
    up, dn = k // 2, (k - 1) // 2
    cfg = [(0, 0)] * (x.ndim - 1) + [(up, dn)]
    return jnp.pad(x, cfg, mode="constant", constant_values=0.0)


if __name__ == "__main__":
    key = jax.random.PRNGKey(0)

    cases = [
        # (shape,        dtype,         k, block_rows)
        ((2, 4, 16),     jnp.float32,   1, None),  # k=1 -> pure-copy fast path
        ((2, 4, 16),     jnp.float32,   3, None),  # symmetric pad, lane-packed
        ((2, 4, 16),     jnp.float32,   4, None),  # asymmetric pad
        ((2, 4, 16),     jnp.bfloat16,  3, None),  # 16-sublane dtype
        ((2, 3, 160),    jnp.float32,   5, None),  # Lo >= 128: unpacked path
        ((6, 16, 16),    jnp.float32,   3, 8),     # multi-block grid + partial last block
    ]
    for shape, dtype, k, block_rows in cases:
        key, sk = jax.random.split(key)
        x = jax.random.normal(sk, shape, dtype=jnp.float32).astype(dtype)
        out = jax.block_until_ready(compensate_pad1d(x, k, block_rows=block_rows))
        ref = _ref_pad(x, k)
        assert out.shape == ref.shape, (out.shape, ref.shape)
        assert out.dtype == x.dtype
        np.testing.assert_array_equal(np.asarray(out), np.asarray(ref))

    print("KERNEL_OK")
</pallas_src>

<mosaic_0001>
module attributes {stable_mosaic.version = 11 : i64} {
  func.func @_pad1d_kernel(%arg0: i32, %arg1: memref<1x128xf32, #tpu.memory_space<vmem>>, %arg2: memref<1x128xf32, #tpu.memory_space<vmem>>) attributes {dimension_semantics = [#tpu.dimension_semantics<parallel>], iteration_bounds = array<i64: 1>, scalar_prefetch = 0 : i64, scratch_operands = 0 : i64, tpu.core_type = #tpu.core_type<tc>, window_params = [{transform_indices = @transform_0, window_bounds = array<i64: 1, 128>}, {transform_indices = @transform_1, window_bounds = array<i64: 1, 128>}]} {
    %c0 = arith.constant 0 : index
    %c0_0 = arith.constant 0 : index
    %0 = vector.load %arg1[%c0, %c0_0] : memref<1x128xf32, #tpu.memory_space<vmem>>, vector<1x128xf32>
    %c0_1 = arith.constant 0 : index
    %c0_2 = arith.constant 0 : index
    %1 = vector.load %arg2[%c0_1, %c0_2] : memref<1x128xf32, #tpu.memory_space<vmem>>, vector<1x128xf32>
    tpu.vector_store %arg2[%c0_1, %c0_2], %0 {strides = array<i32>} : memref<1x128xf32, #tpu.memory_space<vmem>>, vector<1x128xf32>,
    return
  }
  func.func @transform_0(%arg0: i32) -> (i32, i32) {
    %c0_i32 = arith.constant 0 : i32
    %c0_i32_0 = arith.constant 0 : i32
    return %arg0, %c0_i32 : i32, i32
  }
  func.func @transform_1(%arg0: i32) -> (i32, i32) {
    %c0_i32 = arith.constant 0 : i32
    %c0_i32_0 = arith.constant 0 : i32
    return %arg0, %c0_i32 : i32, i32
  }
}

</mosaic_0001>

<llo_original>
// kernel: tpu_custom_call.1
$region0: #{tpu_custom_call.1}
  #allocation0 [shape = 'u32[]', space=smem, size = 0x4, offset = 0x4, fixed_abs, tag = 'smem constant byte address 0x4 - core index']
  #allocation1 [shape = 'u32[144,128]{1,0:T(1,128)}', space=vmem, size = 0x12000, scoped, tag = 'internal scratch']
  %s0 = inlined_call_operand.hbm [shape: f32[1,128], index: 0, kind: input, shape index: {}]
  %s1 = inlined_call_operand.hbm [shape: f32[1,128], index: 1, kind: output, shape index: {}]
  %s2 = sld [smem:[#allocation0]]
  $region18: #{tpu_custom_call.1} parent=0
    _
  %s4 = ssub.s32 1, %s2
  %s5 = scalar_select 0, %s4, %s2
  $region1: #{tpu_custom_call.1} parent=0
    #allocation2 [shape = 'u8[512]{0}', space=vmem, size = 0x400, scoped, tag = 'input window, operand 0, single buffered']
    #allocation3 [shape = 's32[1]{0}', space=sflag, size = 0x4, scoped, tag = 'scoped memory for tpu_custom_call.1']
    #allocation4 [shape = 's32[1]{0}', space=sflag, size = 0x4, scoped, tag = 'scoped memory for tpu_custom_call.1']
    #allocation5 [shape = 'u8[512]{0}', space=vmem, size = 0x400, scoped, tag = 'output window, operand 0, single buffered']
    %6 = vsyncpa [#allocation3], 0
    %7 = vsyncpa [#allocation4], 0
    // Predicated region
    $region2: #{tpu_custom_call.1} parent=1 // pred_check
      _
    $region3: #{tpu_custom_call.1} parent=1 // pred_check_branch
      %9 = sbr.rel (0) target = $region5
    $region4: #{tpu_custom_call.1} parent=1 // pred_region
      %s11 = ssub.s32 16, 16
      %12 = vsyncadd [#allocation3], %s11
      %s14 = sshll.u32 [#allocation2], 4
      %s15 = int_to_ptr.vmem [resolvable:$true] %s14
      %17 = dma.hbm_to_vmem [thread:$0]  %s0, 16, %s15, [#allocation3]
    $region5: #{tpu_custom_call.1} parent=1 // pred_fallthru
      _
    // Predicated region
    $region6: #{tpu_custom_call.1} parent=1 // pred_check
      _
    $region7: #{tpu_custom_call.1} parent=1 // pred_check_branch
      %19 = sbr.rel (0) target = $region9
    $region8: #{tpu_custom_call.1} parent=1 // pred_region
      %20 = dma.done [#allocation3], 16
    $region9: #{tpu_custom_call.1} parent=1 // pred_fallthru
      _
    %v21 = vld [vmem:[#allocation2] sm:$0x1]
    %22 = vst [vmem:[#allocation5] sm:$0x1] %v21
    // Predicated region
    $region10: #{tpu_custom_call.1} parent=1 // pred_check
      _
    $region11: #{tpu_custom_call.1} parent=1 // pred_check_branch
      %24 = sbr.rel (0) target = $region13
    $region12: #{tpu_custom_call.1} parent=1 // pred_region
      %s26 = ssub.s32 16, 16
      %27 = vsyncadd [#allocation4], %s26
      %s29 = sshll.u32 [#allocation5], 4
      %s30 = int_to_ptr.vmem [resolvable:$true] %s29
      %32 = dma.vmem_to_hbm [thread:$0]  %s30, 16, %s1, [#allocation4]
    $region13: #{tpu_custom_call.1} parent=1 // pred_fallthru
      _
    // Predicated region
    $region14: #{tpu_custom_call.1} parent=1 // pred_check
      _
    $region15: #{tpu_custom_call.1} parent=1 // pred_check_branch
      %34 = sbr.rel (0) target = $region17
    $region16: #{tpu_custom_call.1} parent=1 // pred_region
      %35 = dma.done [#allocation4], 16
    $region17: #{tpu_custom_call.1} parent=1 // pred_fallthru
      _
    %36 = vsyncpa [#allocation3], 1
    %37 = vsyncpa [#allocation4], 1

</llo_original>
